<compile_context>
chip_gen: v7x
topology: tpu7x:2x2x1
jax: 0.10.0
libtpu: 0.0.40
codegen_flags: <defaults>
</compile_context>

<pallas_src>
import jax
import jax.numpy as jnp
from jax.experimental import pallas as pl
from jax.experimental.pallas import tpu as pltpu


def mlp_lenet_kernel(x_ref, w1_ref, b1_ref, w2_ref, b2_ref, w3_ref, b3_ref, out_ref):
    # x_ref: (TILE_B, C, H*W) float32, lane-dense last axis.
    hw = x_ref.shape[-1]
    inv_hw = 1.0 / float(hw)

    # Global average pool: single reduce over the flattened spatial axis.
    gap = jnp.sum(x_ref[...], axis=-1) * inv_hw          # (TILE_B, C)

    # fc1 + ReLU
    h1 = jnp.dot(gap, w1_ref[...], preferred_element_type=jnp.float32) + b1_ref[...]
    h1 = jnp.maximum(h1, 0.0)                            # (TILE_B, 120)

    # fc2 + ReLU
    h2 = jnp.dot(h1, w2_ref[...], preferred_element_type=jnp.float32) + b2_ref[...]
    h2 = jnp.maximum(h2, 0.0)                            # (TILE_B, 84)

    # fc3 (padded to a 128-wide class axis; pad cols carry -1e30 bias)
    logits = jnp.dot(h2, w3_ref[...], preferred_element_type=jnp.float32) + b3_ref[...]

    # Numerically stable log_softmax over the (padded) class axis.
    m = jnp.max(logits, axis=-1, keepdims=True)
    shifted = logits - m
    lse = jnp.log(jnp.sum(jnp.exp(shifted), axis=-1, keepdims=True))
    out_ref[...] = shifted - lse


def mlp_lenet_forward(x, w1, b1, w2, b2, w3, b3, *, tile_b=128):
    B, C, H, W = x.shape
    HW = H * W
    x_flat = x.reshape(B, C, HW)                         # lane axis = H*W (mult. of 128)

    h1_dim = w1.shape[1]
    h2_dim = w2.shape[1]
    n_classes = w3.shape[1]

    # Lane-dense output: pad class dim to a multiple of 128.
    nc_pad = max(128, ((n_classes + 127) // 128) * 128)
    w3_p = jnp.zeros((h2_dim, nc_pad), jnp.float32).at[:, :n_classes].set(w3)
    b3_p = jnp.full((1, nc_pad), -1e30, jnp.float32).at[0, :n_classes].set(b3)

    b1_2d = b1.reshape(1, h1_dim)
    b2_2d = b2.reshape(1, h2_dim)

    tb = min(tile_b, B)
    grid = (pl.cdiv(B, tb),)

    out_padded = pl.pallas_call(
        mlp_lenet_kernel,
        out_shape=jax.ShapeDtypeStruct((B, nc_pad), jnp.float32),
        grid=grid,
        in_specs=[
            pl.BlockSpec((tb, C, HW), lambda i: (i, 0, 0)),   # batch-tiled input
            pl.BlockSpec((C, h1_dim), lambda i: (0, 0)),
            pl.BlockSpec((1, h1_dim), lambda i: (0, 0)),
            pl.BlockSpec((h1_dim, h2_dim), lambda i: (0, 0)),
            pl.BlockSpec((1, h2_dim), lambda i: (0, 0)),
            pl.BlockSpec((h2_dim, nc_pad), lambda i: (0, 0)),
            pl.BlockSpec((1, nc_pad), lambda i: (0, 0)),
        ],
        out_specs=pl.BlockSpec((tb, nc_pad), lambda i: (i, 0)),
        compiler_params=pltpu.CompilerParams(
            dimension_semantics=("parallel",),
            vmem_limit_bytes=32 * 1024 * 1024,   # safe on v5e/v6e/v7x; tiles sized well under this
        ),
    )(x_flat, w1, b1_2d, w2, b2_2d, w3_p, b3_p)

    # Drop the padded class columns.
    return out_padded[:, :n_classes]


def reference_jax(x, w1, b1, w2, b2, w3, b3):
    gap = x.mean(axis=-1).mean(axis=-1)                  # .squeeze() is a no-op for B>1, C>1
    h1 = jnp.maximum(gap @ w1 + b1, 0.0)
    h2 = jnp.maximum(h1 @ w2 + b2, 0.0)
    logits = h2 @ w3 + b3
    return jax.nn.log_softmax(logits, axis=-1)


if __name__ == "__main__":
    # Module hyperparameters (fc1: input_nc->120, fc2: 120->84, fc3: 84->no_classes)
    input_nc = 4
    input_h = 16
    input_w = 16
    batch = 2
    no_classes = 10
    hidden1 = 120
    hidden2 = 84

    key = jax.random.PRNGKey(0)
    kx, k1, k2, k3, k4, k5, k6 = jax.random.split(key, 7)

    # Deterministic synthetic parameters (stored as (in, out) layout).
    x = jax.random.normal(kx, (batch, input_nc, input_h, input_w), dtype=jnp.float32)
    w1 = jax.random.normal(k1, (input_nc, hidden1), dtype=jnp.float32) * 0.1
    b1 = jax.random.normal(k2, (hidden1,), dtype=jnp.float32) * 0.1
    w2 = jax.random.normal(k3, (hidden1, hidden2), dtype=jnp.float32) * 0.1
    b2 = jax.random.normal(k4, (hidden2,), dtype=jnp.float32) * 0.1
    w3 = jax.random.normal(k5, (hidden2, no_classes), dtype=jnp.float32) * 0.1
    b3 = jax.random.normal(k6, (no_classes,), dtype=jnp.float32) * 0.1

    out = mlp_lenet_forward(x, w1, b1, w2, b2, w3, b3)
    out = jax.block_until_ready(out)

    ref = reference_jax(x, w1, b1, w2, b2, w3, b3)
    assert out.shape == (batch, no_classes)
    assert jnp.allclose(out, ref, atol=1e-5, rtol=1e-5), "mismatch vs reference"

    print("KERNEL_OK")
</pallas_src>

<mosaic_0001>
module attributes {stable_mosaic.version = 11 : i64} {
  func.func @mlp_lenet_kernel(%arg0: i32, %arg1: memref<2x4x256xf32, #tpu.memory_space<vmem>>, %arg2: memref<4x120xf32, #tpu.memory_space<vmem>>, %arg3: memref<1x120xf32, #tpu.memory_space<vmem>>, %arg4: memref<120x84xf32, #tpu.memory_space<vmem>>, %arg5: memref<1x84xf32, #tpu.memory_space<vmem>>, %arg6: memref<84x128xf32, #tpu.memory_space<vmem>>, %arg7: memref<1x128xf32, #tpu.memory_space<vmem>>, %arg8: memref<2x128xf32, #tpu.memory_space<vmem>>) attributes {dimension_semantics = [#tpu.dimension_semantics<parallel>], iteration_bounds = array<i64: 1>, scalar_prefetch = 0 : i64, scratch_operands = 0 : i64, tpu.core_type = #tpu.core_type<tc>, window_params = [{transform_indices = @transform_0, window_bounds = array<i64: 2, 4, 256>}, {pipeline_mode = #tpu.pipeline_mode<synchronous>, transform_indices = @transform_1, window_bounds = array<i64: 4, 120>}, {pipeline_mode = #tpu.pipeline_mode<synchronous>, transform_indices = @transform_2, window_bounds = array<i64: 1, 120>}, {pipeline_mode = #tpu.pipeline_mode<synchronous>, transform_indices = @transform_3, window_bounds = array<i64: 120, 84>}, {pipeline_mode = #tpu.pipeline_mode<synchronous>, transform_indices = @transform_4, window_bounds = array<i64: 1, 84>}, {pipeline_mode = #tpu.pipeline_mode<synchronous>, transform_indices = @transform_5, window_bounds = array<i64: 84, 128>}, {pipeline_mode = #tpu.pipeline_mode<synchronous>, transform_indices = @transform_6, window_bounds = array<i64: 1, 128>}, {transform_indices = @transform_7, window_bounds = array<i64: 2, 128>}]} {
    %c0 = arith.constant 0 : index
    %c0_0 = arith.constant 0 : index
    %c0_1 = arith.constant 0 : index
    %0 = vector.load %arg1[%c0, %c0_0, %c0_1] : memref<2x4x256xf32, #tpu.memory_space<vmem>>, vector<2x4x256xf32>
    %cst = arith.constant dense<0.000000e+00> : vector<2x4xf32>
    %1 = vector.multi_reduction <add>, %0, %cst [2] : vector<2x4x256xf32> to vector<2x4xf32>
    %cst_2 = arith.constant 3.906250e-03 : f32
    %2 = vector.broadcast %cst_2 : f32 to vector<2x4xf32>
    %3 = arith.mulf %1, %2 : vector<2x4xf32>
    %c0_3 = arith.constant 0 : index
    %c0_4 = arith.constant 0 : index
    %4 = vector.load %arg2[%c0_3, %c0_4] : memref<4x120xf32, #tpu.memory_space<vmem>>, vector<4x120xf32>
    %cst_5 = arith.constant dense<0.000000e+00> : vector<2x120xf32>
    %5 = tpu.matmul %3, %4, %cst_5 {dimension_numbers = #tpu.dot_dimension_numbers<[1], [0], [0], [1], [0, 0, 1, 1], [], []>} : vector<2x4xf32>, vector<4x120xf32>, vector<2x120xf32> -> vector<2x120xf32>
    %c0_6 = arith.constant 0 : index
    %c0_7 = arith.constant 0 : index
    %6 = vector.load %arg3[%c0_6, %c0_7] : memref<1x120xf32, #tpu.memory_space<vmem>>, vector<1x120xf32>
    %7 = vector.broadcast %6 : vector<1x120xf32> to vector<2x120xf32>
    %8 = arith.addf %5, %7 : vector<2x120xf32>
    %cst_8 = arith.constant 0.000000e+00 : f32
    %9 = vector.broadcast %cst_8 : f32 to vector<2x120xf32>
    %10 = arith.maximumf %8, %9 : vector<2x120xf32>
    %c0_9 = arith.constant 0 : index
    %c0_10 = arith.constant 0 : index
    %11 = vector.load %arg4[%c0_9, %c0_10] : memref<120x84xf32, #tpu.memory_space<vmem>>, vector<120x84xf32>
    %cst_11 = arith.constant dense<0.000000e+00> : vector<2x84xf32>
    %12 = tpu.matmul %10, %11, %cst_11 {dimension_numbers = #tpu.dot_dimension_numbers<[1], [0], [0], [1], [0, 0, 1, 1], [], []>} : vector<2x120xf32>, vector<120x84xf32>, vector<2x84xf32> -> vector<2x84xf32>
    %c0_12 = arith.constant 0 : index
    %c0_13 = arith.constant 0 : index
    %13 = vector.load %arg5[%c0_12, %c0_13] : memref<1x84xf32, #tpu.memory_space<vmem>>, vector<1x84xf32>
    %14 = vector.broadcast %13 : vector<1x84xf32> to vector<2x84xf32>
    %15 = arith.addf %12, %14 : vector<2x84xf32>
    %cst_14 = arith.constant 0.000000e+00 : f32
    %16 = vector.broadcast %cst_14 : f32 to vector<2x84xf32>
    %17 = arith.maximumf %15, %16 : vector<2x84xf32>
    %c0_15 = arith.constant 0 : index
    %c0_16 = arith.constant 0 : index
    %18 = vector.load %arg6[%c0_15, %c0_16] : memref<84x128xf32, #tpu.memory_space<vmem>>, vector<84x128xf32>
    %cst_17 = arith.constant dense<0.000000e+00> : vector<2x128xf32>
    %19 = tpu.matmul %17, %18, %cst_17 {dimension_numbers = #tpu.dot_dimension_numbers<[1], [0], [0], [1], [0, 0, 1, 1], [], []>} : vector<2x84xf32>, vector<84x128xf32>, vector<2x128xf32> -> vector<2x128xf32>
    %c0_18 = arith.constant 0 : index
    %c0_19 = arith.constant 0 : index
    %20 = vector.load %arg7[%c0_18, %c0_19] : memref<1x128xf32, #tpu.memory_space<vmem>>, vector<1x128xf32>
    %21 = vector.broadcast %20 : vector<1x128xf32> to vector<2x128xf32>
    %22 = arith.addf %19, %21 : vector<2x128xf32>
    %cst_20 = arith.constant dense<0xFF800000> : vector<2xf32>
    %23 = vector.multi_reduction <maximumf>, %22, %cst_20 [1] : vector<2x128xf32> to vector<2xf32>
    %24 = vector.shape_cast %23 : vector<2xf32> to vector<2x1xf32>
    %25 = vector.broadcast %24 : vector<2x1xf32> to vector<2x128xf32>
    %26 = arith.subf %22, %25 : vector<2x128xf32>
    %27 = math.exp %26 : vector<2x128xf32>
    %cst_21 = arith.constant dense<0.000000e+00> : vector<2xf32>
    %28 = vector.multi_reduction <add>, %27, %cst_21 [1] : vector<2x128xf32> to vector<2xf32>
    %29 = vector.shape_cast %28 : vector<2xf32> to vector<2x1xf32>
    %30 = math.log %29 : vector<2x1xf32>
    %31 = vector.broadcast %30 : vector<2x1xf32> to vector<2x128xf32>
    %32 = arith.subf %26, %31 : vector<2x128xf32>
    %c0_22 = arith.constant 0 : index
    %c0_23 = arith.constant 0 : index
    %33 = vector.load %arg8[%c0_22, %c0_23] : memref<2x128xf32, #tpu.memory_space<vmem>>, vector<2x128xf32>
    tpu.vector_store %arg8[%c0_22, %c0_23], %32 {strides = array<i32>} : memref<2x128xf32, #tpu.memory_space<vmem>>, vector<2x128xf32>,
    return
  }
  func.func @transform_0(%arg0: i32) -> (i32, i32, i32) {
    %c0_i32 = arith.constant 0 : i32
    %c0_i32_0 = arith.constant 0 : i32
    %c0_i32_1 = arith.constant 0 : i32
    return %arg0, %c0_i32, %c0_i32_0 : i32, i32, i32
  }
  func.func @transform_1(%arg0: i32) -> (i32, i32) {
    %c0_i32 = arith.constant 0 : i32
    %c0_i32_0 = arith.constant 0 : i32
    %c0_i32_1 = arith.constant 0 : i32
    return %c0_i32, %c0_i32_0 : i32, i32
  }
  func.func @transform_2(%arg0: i32) -> (i32, i32) {
    %c0_i32 = arith.constant 0 : i32
    %c0_i32_0 = arith.constant 0 : i32
    %c0_i32_1 = arith.constant 0 : i32
    return %c0_i32, %c0_i32_0 : i32, i32
  }
  func.func @transform_3(%arg0: i32) -> (i32, i32) {
    %c0_i32 = arith.constant 0 : i32
    %c0_i32_0 = arith.constant 0 : i32
    %c0_i32_1 = arith.constant 0 : i32
    return %c0_i32, %c0_i32_0 : i32, i32
  }
  func.func @transform_4(%arg0: i32) -> (i32, i32) {
    %c0_i32 = arith.constant 0 : i32
    %c0_i32_0 = arith.constant 0 : i32
    %c0_i32_1 = arith.constant 0 : i32
    return %c0_i32, %c0_i32_0 : i32, i32
  }
  func.func @transform_5(%arg0: i32) -> (i32, i32) {
    %c0_i32 = arith.constant 0 : i32
    %c0_i32_0 = arith.constant 0 : i32
    %c0_i32_1 = arith.constant 0 : i32
    return %c0_i32, %c0_i32_0 : i32, i32
  }
  func.func @transform_6(%arg0: i32) -> (i32, i32) {
    %c0_i32 = arith.constant 0 : i32
    %c0_i32_0 = arith.constant 0 : i32
    %c0_i32_1 = arith.constant 0 : i32
    return %c0_i32, %c0_i32_0 : i32, i32
  }
  func.func @transform_7(%arg0: i32) -> (i32, i32) {
    %c0_i32 = arith.constant 0 : i32
    %c0_i32_0 = arith.constant 0 : i32
    return %arg0, %c0_i32 : i32, i32
  }
}

</mosaic_0001>

<llo_original>
// kernel: tpu_custom_call.1
$region0: #{tpu_custom_call.1}
  #allocation0 [shape = 'u32[]', space=smem, size = 0x4, offset = 0x4, fixed_abs, tag = 'smem constant byte address 0x4 - core index']
  #allocation1 [shape = 'u32[144,128]{1,0:T(1,128)}', space=vmem, size = 0x12000, scoped, tag = 'internal scratch']
  %s0 = inlined_call_operand.vmem [shape: f32[2,4,256], index: 0, kind: input, shape index: {}]
  %s1 = inlined_call_operand.vmem [shape: f32[4,120], index: 1, kind: input, shape index: {}]
  %s2 = inlined_call_operand.vmem [shape: f32[1,120], index: 2, kind: input, shape index: {}]
  %s3 = inlined_call_operand.vmem [shape: f32[120,84], index: 3, kind: input, shape index: {}]
  %s4 = inlined_call_operand.vmem [shape: f32[1,84], index: 4, kind: input, shape index: {}]
  %s5 = inlined_call_operand.vmem [shape: f32[84,128], index: 5, kind: input, shape index: {}]
  %s6 = inlined_call_operand.vmem [shape: f32[1,128], index: 6, kind: input, shape index: {}]
  %s7 = inlined_call_operand.hbm [shape: f32[2,128], index: 7, kind: output, shape index: {}]
  %s8 = sld [smem:[#allocation0]]
  $region38: #{tpu_custom_call.1} parent=0
    _
  %s10 = ssub.s32 1, %s8
  %s11 = scalar_select 0, %s10, %s8
  $region1: #{tpu_custom_call.1} parent=0
    #allocation2 [shape = 'u8[1024]{0}', space=vmem, size = 0x400, scoped, tag = 'output window, operand 0, single buffered']
    #allocation3 [shape = 's32[1]{0}', space=sflag, size = 0x4, scoped, tag = 'scoped memory for tpu_custom_call.1']
    %12 = vsyncpa [#allocation3], 0
    // Predicated region
    $region2: #{tpu_custom_call.1} parent=1 // pred_check
      _
    $region3: #{tpu_custom_call.1} parent=1 // pred_check_branch
      %14 = sbr.rel (0) target = $region5
    $region4: #{tpu_custom_call.1} parent=1 // pred_region
      _
    $region5: #{tpu_custom_call.1} parent=1 // pred_fallthru
      _
    // Predicated region
    $region6: #{tpu_custom_call.1} parent=1 // pred_check
      _
    $region7: #{tpu_custom_call.1} parent=1 // pred_check_branch
      %16 = sbr.rel (0) target = $region9
    $region8: #{tpu_custom_call.1} parent=1 // pred_region
      _
    $region9: #{tpu_custom_call.1} parent=1 // pred_fallthru
      _
    // Predicated region
    $region10: #{tpu_custom_call.1} parent=1 // pred_check
      _
    $region11: #{tpu_custom_call.1} parent=1 // pred_check_branch
      %18 = sbr.rel (0) target = $region13
    $region12: #{tpu_custom_call.1} parent=1 // pred_region
      _
    $region13: #{tpu_custom_call.1} parent=1 // pred_fallthru
      _
    // Predicated region
    $region14: #{tpu_custom_call.1} parent=1 // pred_check
      _
    $region15: #{tpu_custom_call.1} parent=1 // pred_check_branch
      %20 = sbr.rel (0) target = $region17
    $region16: #{tpu_custom_call.1} parent=1 // pred_region
      _
    $region17: #{tpu_custom_call.1} parent=1 // pred_fallthru
      _
    // Predicated region
    $region18: #{tpu_custom_call.1} parent=1 // pred_check
      _
    $region19: #{tpu_custom_call.1} parent=1 // pred_check_branch
      %22 = sbr.rel (0) target = $region21
    $region20: #{tpu_custom_call.1} parent=1 // pred_region
      _
    $region21: #{tpu_custom_call.1} parent=1 // pred_fallthru
      _
    // Predicated region
    $region22: #{tpu_custom_call.1} parent=1 // pred_check
      _
    $region23: #{tpu_custom_call.1} parent=1 // pred_check_branch
      %24 = sbr.rel (0) target = $region25
    $region24: #{tpu_custom_call.1} parent=1 // pred_region
      _
    $region25: #{tpu_custom_call.1} parent=1 // pred_fallthru
      _
    // Predicated region
    $region26: #{tpu_custom_call.1} parent=1 // pred_check
      _
    $region27: #{tpu_custom_call.1} parent=1 // pred_check_branch
      %26 = sbr.rel (0) target = $region29
    $region28: #{tpu_custom_call.1} parent=1 // pred_region
      _
    $region29: #{tpu_custom_call.1} parent=1 // pred_fallthru
      _
    %v27 = vld [vmem:[%s0] sm:$0xff]
    %v28 = vld [vmem:[%s0 + $0x8] sm:$0xff]
    %v31 = vcombine.high %v27, %v27
    %v32 = vcombine.high %v28, %v28
    %vm35 = vcmask 1043456
    %v36 = vsel %vm35, %v27, 0.0
    %v37 = vsel %vm35, %v31, 0.0
    %v38 = vadd.f32 %v36, %v37
    %39 = vadd.xlane.f32.xlu0 %v38
    %v40 = vpop.xlane.xlu0 %39
    %v41 = vsel %vm35, %v28, 0.0
    %v42 = vsel %vm35, %v32, 0.0
    %v43 = vadd.f32 %v41, %v42
    %44 = vadd.xlane.f32.xlu0 %v43
    %v45 = vpop.xlane.xlu0 %44
    %v46 = vmul.f32 %v40, 0.00390625
    %v47 = vmul.f32 %v45, 0.00390625
    %v48 = vld [vmem:[%s1] sm:$0xf]
    %v49 = vld [vmem:[%s2] sm:$0x1]
    %v51 = vlaneseq
    %v52 = vshrl.u32 %v51, 7
    %v53 = vsub.s32 0, %v52
    %v54 = vrot.slane %v49, %v53
    %v58 = vlaneseq
    %v59 = vand.u32 %v58, 127
    %v60 = vlaneseq
    %v61 = vshrl.u32 %v60, 7
    %v62 = vsub.s32 %v59, %v61
    %v63 = vrot.slane %v46, %v62
    %v64 = vlaneseq
    %v65 = vshrl.u32 %v64, 7
    %v66 = vsub.s32 %v59, %v65
    %v67 = vrot.slane %v47, %v66
    %vm68 = vcmask 1041409
    %v69 = vsel %vm68, %v67, %v63
    %vm70 = vcmask 31744
    %v71 = vsel %vm70, %v69, 0
    %v74 = vsel %vm35, %v48, 0
    %76 = vmatprep.subr.mxu0 0.0
    %77 = vmatpush1.msra.mxu0 %v74
    %78 = vmatprep.subr.mxu0 0.0
    %79 = vmatpush1.msra.mxu0 0.0
    %80 = vmatprep.subr.mxu0 0.0
    %81 = vmatpush1.msra.mxu0 0.0
    %82 = vmatprep.subr.mxu0 0.0
    %83 = vmatpush1.msra.mxu0 0.0
    %84 = vmatprep.subr.mxu0 0.0
    %85 = vmatpush1.msra.mxu0 0.0
    %86 = vmatprep.subr.mxu0 0.0
    %87 = vmatpush1.msra.mxu0 0.0
    %88 = vmatprep.subr.mxu0 0.0
    %89 = vmatpush1.msra.mxu0 0.0
    %90 = vmatprep.subr.mxu0 0.0
    %91 = vmatpush1.msra.mxu0 0.0
    %92 = vmatprep.subr.mxu0 0.0
    %93 = vmatpush1.msra.mxu0 0.0
    %94 = vmatprep.subr.mxu0 0.0
    %95 = vmatpush1.msra.mxu0 0.0
    %96 = vmatprep.subr.mxu0 0.0
    %97 = vmatpush1.msra.mxu0 0.0
    %98 = vmatprep.subr.mxu0 0.0
    %99 = vmatpush1.msra.mxu0 0.0
    %100 = vmatprep.subr.mxu0 0.0
    %101 = vmatpush1.msra.mxu0 0.0
    %102 = vmatprep.subr.mxu0 0.0
    %103 = vmatpush1.msra.mxu0 0.0
    %104 = vmatprep.subr.mxu0 0.0
    %105 = vmatpush1.msra.mxu0 0.0
    %106 = vmatprep.subr.mxu0 0.0
    %107 = vmatpush1.msra.mxu0 0.0
    %108 = vmatprep.subr.mxu0 0.0
    %109 = vmatpush1.msra.mxu0 0.0
    %110 = vmatprep.subr.mxu0 0.0
    %111 = vmatpush1.msra.mxu0 0.0
    %112 = vmatprep.subr.mxu0 0.0
    %113 = vmatpush1.msra.mxu0 0.0
    %114 = vmatprep.subr.mxu0 0.0
    %115 = vmatpush1.msra.mxu0 0.0
    %116 = vmatprep.subr.mxu0 0.0
    %117 = vmatpush1.msra.mxu0 0.0
    %118 = vmatprep.subr.mxu0 0.0
    %119 = vmatpush1.msra.mxu0 0.0
    %120 = vmatprep.subr.mxu0 0.0
    %121 = vmatpush1.msra.mxu0 0.0
    %122 = vmatprep.subr.mxu0 0.0
    %123 = vmatpush1.msra.mxu0 0.0
    %124 = vmatprep.subr.mxu0 0.0
    %125 = vmatpush1.msra.mxu0 0.0
    %126 = vmatprep.subr.mxu0 0.0
    %127 = vmatpush1.msra.mxu0 0.0
    %128 = vmatprep.subr.mxu0 0.0
    %129 = vmatpush1.msra.mxu0 0.0
    %130 = vmatprep.subr.mxu0 0.0
    %131 = vmatpush1.msra.mxu0 0.0
    %132 = vmatprep.subr.mxu0 0.0
    %133 = vmatpush1.msra.mxu0 0.0
    %134 = vmatprep.subr.mxu0 0.0
    %135 = vmatpush1.msra.mxu0 0.0
    %136 = vmatprep.subr.mxu0 0.0
    %137 = vmatpush1.msra.mxu0 0.0
    %138 = vmatprep.subr.mxu0 0.0
    %139 = vmatpush1.msra.mxu0 0.0
    %140 = vmatprep.mubr.f32.mxu0 0.0
    %141 = vmatmul.mubr.f32.gmra.mrb[0].mxu0 %v71
    %v142 = vpop.f32.mrb[0].mxu0
    %v143 = vadd.f32 %v54, %v142
    %v144 = vpop.f32.mrb[0].mxu0
    %145 = vdwg.mxu0
    %v146 = vmax.f32 %v143, 0.0
    %v147 = vld [vmem:[%s3] sm:$0xff]
    %v148 = vld [vmem:[%s3 + $0x8] sm:$0xff]
    %v149 = vld [vmem:[%s3 + $0x10] sm:$0xff]
    %v150 = vld [vmem:[%s3 + $0x18] sm:$0xff]
    %v151 = vld [vmem:[%s3 + $0x20] sm:$0xff]
    %v152 = vld [vmem:[%s3 + $0x28] sm:$0xff]
    %v153 = vld [vmem:[%s3 + $0x30] sm:$0xff]
    %v154 = vld [vmem:[%s3 + $0x38] sm:$0xff]
    %v155 = vld [vmem:[%s3 + $0x40] sm:$0xff]
    %v156 = vld [vmem:[%s3 + $0x48] sm:$0xff]
    %v157 = vld [vmem:[%s3 + $0x50] sm:$0xff]
    %v158 = vld [vmem:[%s3 + $0x58] sm:$0xff]
    %v159 = vld [vmem:[%s3 + $0x60] sm:$0xff]
    %v160 = vld [vmem:[%s3 + $0x68] sm:$0xff]
    %v161 = vld [vmem:[%s3 + $0x70] sm:$0xff]
    %v162 = vld [vmem:[%s4] sm:$0x1]
    %v164 = vlaneseq
    %v165 = vshrl.u32 %v164, 7
    %v166 = vsub.s32 0, %v165
    %v167 = vrot.slane %v162, %v166
    %vm169 = vcmask 982016
    %v171 = vsel %vm169, %v146, 0
    %173 = vmatprep.subr.mxu0 0.0
    %174 = vmatpush1.msra.mxu0 %v147
    %175 = vmatprep.subr.mxu0 0.0
    %176 = vmatpush1.msra.mxu0 %v148
    %177 = vmatprep.subr.mxu0 0.0
    %178 = vmatpush1.msra.mxu0 %v149
    %179 = vmatprep.subr.mxu0 0.0
    %180 = vmatpush1.msra.mxu0 %v150
    %181 = vmatprep.subr.mxu0 0.0
    %182 = vmatpush1.msra.mxu0 %v151
    %183 = vmatprep.subr.mxu0 0.0
    %184 = vmatpush1.msra.mxu0 %v152
    %185 = vmatprep.subr.mxu0 0.0
    %186 = vmatpush1.msra.mxu0 %v153
    %187 = vmatprep.subr.mxu0 0.0
    %188 = vmatpush1.msra.mxu0 %v154
    %189 = vmatprep.subr.mxu0 0.0
    %190 = vmatpush1.msra.mxu0 %v155
    %191 = vmatprep.subr.mxu0 0.0
    %192 = vmatpush1.msra.mxu0 %v156
    %193 = vmatprep.subr.mxu0 0.0
    %194 = vmatpush1.msra.mxu0 %v157
    %195 = vmatprep.subr.mxu0 0.0
    %196 = vmatpush1.msra.mxu0 %v158
    %197 = vmatprep.subr.mxu0 0.0
    %198 = vmatpush1.msra.mxu0 %v159
    %199 = vmatprep.subr.mxu0 0.0
    %200 = vmatpush1.msra.mxu0 %v160
    %201 = vmatprep.subr.mxu0 0.0
    %202 = vmatpush1.msra.mxu0 %v161
    %203 = vmatprep.subr.mxu0 0.0
    %204 = vmatpush1.msra.mxu0 0.0
    %205 = vmatprep.subr.mxu0 0.0
    %206 = vmatpush1.msra.mxu0 0.0
    %207 = vmatprep.subr.mxu0 0.0
    %208 = vmatpush1.msra.mxu0 0.0
    %209 = vmatprep.subr.mxu0 0.0
    %210 = vmatpush1.msra.mxu0 0.0
    %211 = vmatprep.subr.mxu0 0.0
    %212 = vmatpush1.msra.mxu0 0.0
    %213 = vmatprep.subr.mxu0 0.0
    %214 = vmatpush1.msra.mxu0 0.0
    %215 = vmatprep.subr.mxu0 0.0
    %216 = vmatpush1.msra.mxu0 0.0
    %217 = vmatprep.subr.mxu0 0.0
    %218 = vmatpush1.msra.mxu0 0.0
    %219 = vmatprep.subr.mxu0 0.0
    %220 = vmatpush1.msra.mxu0 0.0
    %221 = vmatprep.subr.mxu0 0.0
    %222 = vmatpush1.msra.mxu0 0.0
    %223 = vmatprep.subr.mxu0 0.0
    %224 = vmatpush1.msra.mxu0 0.0
    %225 = vmatprep.subr.mxu0 0.0
    %226 = vmatpush1.msra.mxu0 0.0
    %227 = vmatprep.subr.mxu0 0.0
    %228 = vmatpush1.msra.mxu0 0.0
    %229 = vmatprep.subr.mxu0 0.0
    %230 = vmatpush1.msra.mxu0 0.0
    %231 = vmatprep.subr.mxu0 0.0
    %232 = vmatpush1.msra.mxu0 0.0
    %233 = vmatprep.subr.mxu0 0.0
    %234 = vmatpush1.msra.mxu0 0.0
    %235 = vmatprep.subr.mxu0 0.0
    %236 = vmatpush1.msra.mxu0 0.0
    %237 = vmatprep.mubr.f32.mxu0 0.0
    %238 = vmatmul.mubr.f32.gmra.mrb[0].mxu0 %v171
    %v239 = vpop.f32.mrb[0].mxu0
    %v240 = vadd.f32 %v167, %v239
    %v241 = vpop.f32.mrb[0].mxu0
    %242 = vdwg.mxu0
    %v243 = vmax.f32 %v240, 0.0
    %v244 = vld [vmem:[%s5] sm:$0xff]
    %v245 = vld [vmem:[%s5 + $0x8] sm:$0xff]
    %v246 = vld [vmem:[%s5 + $0x10] sm:$0xff]
    %v247 = vld [vmem:[%s5 + $0x18] sm:$0xff]
    %v248 = vld [vmem:[%s5 + $0x20] sm:$0xff]
    %v249 = vld [vmem:[%s5 + $0x28] sm:$0xff]
    %v250 = vld [vmem:[%s5 + $0x30] sm:$0xff]
    %v251 = vld [vmem:[%s5 + $0x38] sm:$0xff]
    %v252 = vld [vmem:[%s5 + $0x40] sm:$0xff]
    %v253 = vld [vmem:[%s5 + $0x48] sm:$0xff]
    %v254 = vld [vmem:[%s5 + $0x50] sm:$0xf]
    %v255 = vld [vmem:[%s6] sm:$0x1]
    %v257 = vlaneseq
    %v258 = vshrl.u32 %v257, 7
    %v259 = vsub.s32 0, %v258
    %v260 = vrot.slane %v255, %v259
    %vm262 = vcmask 687104
    %v264 = vsel %vm262, %v243, 0
    %v267 = vsel %vm35, %v254, 0
    %269 = vmatprep.subr.mxu0 0.0
    %270 = vmatpush1.msra.mxu0 %v244
    %271 = vmatprep.subr.mxu0 0.0
    %272 = vmatpush1.msra.mxu0 %v245
    %273 = vmatprep.subr.mxu0 0.0
    %274 = vmatpush1.msra.mxu0 %v246
    %275 = vmatprep.subr.mxu0 0.0
    %276 = vmatpush1.msra.mxu0 %v247
    %277 = vmatprep.subr.mxu0 0.0
    %278 = vmatpush1.msra.mxu0 %v248
    %279 = vmatprep.subr.mxu0 0.0
    %280 = vmatpush1.msra.mxu0 %v249
    %281 = vmatprep.subr.mxu0 0.0
    %282 = vmatpush1.msra.mxu0 %v250
    %283 = vmatprep.subr.mxu0 0.0
    %284 = vmatpush1.msra.mxu0 %v251
    %285 = vmatprep.subr.mxu0 0.0
    %286 = vmatpush1.msra.mxu0 %v252
    %287 = vmatprep.subr.mxu0 0.0
    %288 = vmatpush1.msra.mxu0 %v253
    %289 = vmatprep.subr.mxu0 0.0
    %290 = vmatpush1.msra.mxu0 %v267
    %291 = vmatprep.subr.mxu0 0.0
    %292 = vmatpush1.msra.mxu0 0.0
    %293 = vmatprep.subr.mxu0 0.0
    %294 = vmatpush1.msra.mxu0 0.0
    %295 = vmatprep.subr.mxu0 0.0
    %296 = vmatpush1.msra.mxu0 0.0
    %297 = vmatprep.subr.mxu0 0.0
    %298 = vmatpush1.msra.mxu0 0.0
    %299 = vmatprep.subr.mxu0 0.0
    %300 = vmatpush1.msra.mxu0 0.0
    %301 = vmatprep.subr.mxu0 0.0
    %302 = vmatpush1.msra.mxu0 0.0
    %303 = vmatprep.subr.mxu0 0.0
    %304 = vmatpush1.msra.mxu0 0.0
    %305 = vmatprep.subr.mxu0 0.0
    %306 = vmatpush1.msra.mxu0 0.0
    %307 = vmatprep.subr.mxu0 0.0
    %308 = vmatpush1.msra.mxu0 0.0
    %309 = vmatprep.subr.mxu0 0.0
    %310 = vmatpush1.msra.mxu0 0.0
    %311 = vmatprep.subr.mxu0 0.0
    %312 = vmatpush1.msra.mxu0 0.0
    %313 = vmatprep.subr.mxu0 0.0
    %314 = vmatpush1.msra.mxu0 0.0
    %315 = vmatprep.subr.mxu0 0.0
    %316 = vmatpush1.msra.mxu0 0.0
    %317 = vmatprep.subr.mxu0 0.0
    %318 = vmatpush1.msra.mxu0 0.0
    %319 = vmatprep.subr.mxu0 0.0
    %320 = vmatpush1.msra.mxu0 0.0
    %321 = vmatprep.subr.mxu0 0.0
    %322 = vmatpush1.msra.mxu0 0.0
    %323 = vmatprep.subr.mxu0 0.0
    %324 = vmatpush1.msra.mxu0 0.0
    %325 = vmatprep.subr.mxu0 0.0
    %326 = vmatpush1.msra.mxu0 0.0
    %327 = vmatprep.subr.mxu0 0.0
    %328 = vmatpush1.msra.mxu0 0.0
    %329 = vmatprep.subr.mxu0 0.0
    %330 = vmatpush1.msra.mxu0 0.0
    %331 = vmatprep.subr.mxu0 0.0
    %332 = vmatpush1.msra.mxu0 0.0
    %333 = vmatprep.mubr.f32.mxu0 0.0
    %334 = vmatmul.mubr.f32.gmra.mrb[0].mxu0 %v264
    %v335 = vpop.f32.mrb[0].mxu0
    %v336 = vadd.f32 %v260, %v335
    %v337 = vpop.f32.mrb[0].mxu0
    %338 = vdwg.mxu0
    %vm339 = vcmask 1041408
    %v340 = vsel %vm339, %v336, -inf
    %341 = vmax.xlane.f32.xlu0 %v340
    %v342 = vpop.xlane.xlu0 %341
    %v343 = vsub.f32 %v336, %v342
    %v344 = vmul.f32 %v343, 1.442695
    %v345 = vpow.pop %v344
    %v346 = vsel %vm339, %v345, 0.0
    %347 = vadd.xlane.f32.xlu0 %v346
    %v348 = vpop.xlane.xlu0 %347
    %v349 = vlog2.pop %v348
    %v350 = vmul.f32 %v349, 0.6931472
    %v351 = vsub.f32 %v343, %v350
    %352 = vst [vmem:[#allocation2] sm:$0x3] %v351
    // Predicated region
    $region30: #{tpu_custom_call.1} parent=1 // pred_check
      _
    $region31: #{tpu_custom_call.1} parent=1 // pred_check_branch
      %354 = sbr.rel (0) target = $region33
    $region32: #{tpu_custom_call.1} parent=1 // pred_region
      %s356 = ssub.s32 32, 32
      %357 = vsyncadd [#allocation3], %s356
      %s359 = sshll.u32 [#allocation2], 4
      %s360 = int_to_ptr.vmem [resolvable:$true] %s359
      %362 = dma.vmem_to_hbm [thread:$0]  %s360, 32, %s7, [#allocation3]
    $region33: #{tpu_custom_call.1} parent=1 // pred_fallthru
      _
    // Predicated region
    $region34: #{tpu_custom_call.1} parent=1 // pred_check
      _
    $region35: #{tpu_custom_call.1} parent=1 // pred_check_branch
      %364 = sbr.rel (0) target = $region37
    $region36: #{tpu_custom_call.1} parent=1 // pred_region
      %365 = dma.done [#allocation3], 32
    $region37: #{tpu_custom_call.1} parent=1 // pred_fallthru
      _
    %366 = vsyncpa [#allocation3], 1

</llo_original>
